<compile_context>
chip_gen: v7x
topology: tpu7x:2x2x1
jax: 0.10.0
libtpu: 0.0.40
codegen_flags: <defaults>
</compile_context>

<pallas_src>
import jax
import jax.numpy as jnp
from jax.experimental import pallas as pl
from jax.experimental.pallas import tpu as pltpu

LANE = 128  # lane-dense feature padding / node-tile granularity


# ----------------------------- small helpers ------------------------------

def _round_up(x, m):
    return ((x + m - 1) // m) * m


def _pad2(x, rows, cols):
    r, c = x.shape
    return jnp.pad(x, ((0, rows - r), (0, cols - c)))


def _vmem_capacity_bytes():
    try:
        info = pltpu.get_tpu_info()
        return int(getattr(info, "vmem_capacity_bytes", 64 << 20))
    except Exception:
        return 64 << 20  # conservative (v7x per-TC size)


def _vmem_limit_bytes():
    # ~75% of per-core VMEM: ~48 MiB on v7x, ~96 MiB on v5e/v6e.
    return max(32 << 20, min(96 << 20, (_vmem_capacity_bytes() * 3) // 4))


def prepare_adjacency(adj):
    """Pad A[dst, src] to a multiple of 128 and cast to bf16 (exact for 0/1).

    Call once per graph, outside the per-step forward, so the full N^2 pad /
    cast is not repeated on an A-read-bound problem.
    """
    n = adj.shape[0]
    n_p = _round_up(n, LANE)
    a = adj.astype(jnp.bfloat16)
    if a.shape != (n_p, n_p):
        a = _pad2(a, n_p, n_p)
    return a


def _pick_tiles(n_p):
    # Reduction (K) tile of A: 256 fills the 2x256^2 MXU on v6e/v7x when the
    # padded node count allows it; 128 otherwise (also v5e-native).
    tk = 256 if n_p % 256 == 0 else 128
    # Dst-row (M) tile: as large as VMEM comfortably allows, but always keep
    # >= 2 row tiles so the "parallel" axis shards across both v7x TCs.
    tm = 128
    for cand in (512, 256):
        if n_p % cand == 0 and n_p // cand >= 2:
            tm = cand
            break
    return tm, tk


# -------------------------------- kernels ----------------------------------

def _gcn_fused_kernel(a_ref, x_ref, w1_ref, b1_ref, w2_ref, b2_ref, o_ref):
    """Whole GCN in one VMEM-resident body (small-graph fast path)."""
    a = a_ref[...].astype(jnp.float32)          # A is exactly 0/1 -> exact cast
    xw1 = jnp.dot(x_ref[...], w1_ref[...], preferred_element_type=jnp.float32)
    h1 = jnp.maximum(
        jnp.dot(a, xw1, preferred_element_type=jnp.float32) + b1_ref[...], 0.0)
    z = jnp.dot(h1, w2_ref[...], preferred_element_type=jnp.float32)
    o_ref[...] = jnp.dot(a, z, preferred_element_type=jnp.float32) + b2_ref[...]


def _xw1_kernel(x_ref, w1_ref, o_ref):
    """Prologue: XW1 = X @ W1 (tiny O(N) matmul; removes W1 from the hot loop).

    TODO(synk): tile the in_feats (K) dimension for very large feature dims;
    at typical GCN sizes a whole row-block of X fits VMEM.
    """
    o_ref[...] = jnp.dot(x_ref[...], w1_ref[...],
                         preferred_element_type=jnp.float32)


def _layer1_kernel(a_ref, xw1_ref, b1_ref, w2_ref, z_ref, acc_ref):
    """Z = relu(A @ (X@W1) + b1) @ W2  (class projection fused here so the
    second aggregation only streams the narrow class dim)."""
    k = pl.program_id(1)

    @pl.when(k == 0)
    def _():
        acc_ref[...] = jnp.zeros_like(acc_ref)

    acc_ref[...] += jnp.dot(a_ref[...].astype(jnp.float32), xw1_ref[...],
                            preferred_element_type=jnp.float32)

    @pl.when(k == pl.num_programs(1) - 1)
    def _():
        h1 = jnp.maximum(acc_ref[...] + b1_ref[...], 0.0)
        z_ref[...] = jnp.dot(h1, w2_ref[...], preferred_element_type=jnp.float32)


def _layer2_kernel(a_ref, z_ref, b2_ref, o_ref):
    """out = A @ Z + b2, accumulated directly in the resident output block."""
    k = pl.program_id(1)

    @pl.when(k == 0)
    def _():
        o_ref[...] = jnp.zeros_like(o_ref)

    o_ref[...] += jnp.dot(a_ref[...].astype(jnp.float32), z_ref[...],
                          preferred_element_type=jnp.float32)

    @pl.when(k == pl.num_programs(1) - 1)
    def _():
        o_ref[...] = o_ref[...] + b2_ref[...]


# ------------------------------- forward -----------------------------------

def gcn_forward(adj, x, w1, b1, w2, b2, *, force_tiled=False):
    """out = A @ relu(A @ X @ W1 + b1) @ W2 + b2 via Pallas TPU kernels.

    `adj` may be the raw (n, n) dense adjacency, or the result of
    prepare_adjacency() (pre-padded bf16) to avoid re-padding on every call.
    """
    n, in_feats = x.shape
    hidden = w1.shape[1]
    num_classes = w2.shape[1]

    n_p = _round_up(n, LANE)
    f_p = _round_up(in_feats, LANE)
    h_p = _round_up(hidden, LANE)
    c_p = _round_up(num_classes, LANE)

    if adj.shape == (n_p, n_p) and adj.dtype == jnp.bfloat16:
        a_p = adj
    else:
        a_p = prepare_adjacency(adj)

    # Zero padding keeps aggregation sums exact (padded rows/cols contribute 0).
    x_p = _pad2(x.astype(jnp.float32), n_p, f_p)
    w1_p = _pad2(w1.astype(jnp.float32), f_p, h_p)
    b1_p = _pad2(jnp.asarray(b1, jnp.float32).reshape(1, -1), 1, h_p)
    w2_p = _pad2(w2.astype(jnp.float32), h_p, c_p)
    b2_p = _pad2(jnp.asarray(b2, jnp.float32).reshape(1, -1), 1, c_p)

    vmem_limit = _vmem_limit_bytes()

    # ---------------- fully fused single-call fast path ----------------
    fused_bytes = (n_p * n_p * 2                              # A (bf16)
                   + n_p * (f_p + 2 * h_p + 2 * c_p) * 4      # X, XW1, H1, Z, out
                   + (f_p * h_p + h_p * c_p + h_p + c_p) * 4)  # weights/biases
    if not force_tiled and fused_bytes <= (vmem_limit * 3) // 5:
        out_p = pl.pallas_call(
            _gcn_fused_kernel,
            out_shape=jax.ShapeDtypeStruct((n_p, c_p), jnp.float32),
            compiler_params=pltpu.CompilerParams(vmem_limit_bytes=vmem_limit),
        )(a_p, x_p, w1_p, b1_p, w2_p, b2_p)
        return out_p[:n, :num_classes]

    # ----------------------------- tiled path ---------------------------
    tm, tk = _pick_tiles(n_p)
    grid = (n_p // tm, n_p // tk)
    comp = pltpu.CompilerParams(
        dimension_semantics=("parallel", "arbitrary"),
        vmem_limit_bytes=vmem_limit,
    )

    # Prologue: XW1 = X @ W1
    xw1 = pl.pallas_call(
        _xw1_kernel,
        out_shape=jax.ShapeDtypeStruct((n_p, h_p), jnp.float32),
        grid_spec=pltpu.PrefetchScalarGridSpec(
            num_scalar_prefetch=0,
            grid=(n_p // tm,),
            in_specs=[
                pl.BlockSpec((tm, f_p), lambda i: (i, 0)),
                pl.BlockSpec((f_p, h_p), lambda i: (0, 0)),
            ],
            out_specs=pl.BlockSpec((tm, h_p), lambda i: (i, 0)),
        ),
        compiler_params=pltpu.CompilerParams(
            dimension_semantics=("parallel",),
            vmem_limit_bytes=vmem_limit,
        ),
    )(x_p, w1_p)

    # Layer 1 aggregation (+ fused class projection): Z = relu(A@XW1 + b1) @ W2
    z_p = pl.pallas_call(
        _layer1_kernel,
        out_shape=jax.ShapeDtypeStruct((n_p, c_p), jnp.float32),
        grid_spec=pltpu.PrefetchScalarGridSpec(
            num_scalar_prefetch=0,
            grid=grid,
            in_specs=[
                pl.BlockSpec((tm, tk), lambda i, k: (i, k)),     # A[dst, src]
                pl.BlockSpec((tk, h_p), lambda i, k: (k, 0)),    # XW1[src, :]
                pl.BlockSpec((1, h_p), lambda i, k: (0, 0)),     # b1
                pl.BlockSpec((h_p, c_p), lambda i, k: (0, 0)),   # W2
            ],
            out_specs=pl.BlockSpec((tm, c_p), lambda i, k: (i, 0)),
            scratch_shapes=[pltpu.VMEM((tm, h_p), jnp.float32)],
        ),
        compiler_params=comp,
    )(a_p, xw1, b1_p, w2_p)

    # Layer 2 aggregation over the narrow class dim: out = A @ Z + b2
    out_p = pl.pallas_call(
        _layer2_kernel,
        out_shape=jax.ShapeDtypeStruct((n_p, c_p), jnp.float32),
        grid_spec=pltpu.PrefetchScalarGridSpec(
            num_scalar_prefetch=0,
            grid=grid,
            in_specs=[
                pl.BlockSpec((tm, tk), lambda i, k: (i, k)),     # A[dst, src]
                pl.BlockSpec((tk, c_p), lambda i, k: (k, 0)),    # Z[src, :]
                pl.BlockSpec((1, c_p), lambda i, k: (0, 0)),     # b2
            ],
            out_specs=pl.BlockSpec((tm, c_p), lambda i, k: (i, 0)),
        ),
        compiler_params=comp,
    )(a_p, z_p, b2_p)

    return out_p[:n, :num_classes]


def gcn_reference(adj, x, w1, b1, w2, b2):
    dot = lambda a, b: jax.lax.dot(a, b, precision=jax.lax.Precision.HIGHEST)
    h1 = jnp.maximum(dot(dot(adj, x), w1) + jnp.reshape(b1, (1, -1)), 0.0)
    return dot(dot(adj, h1), w2) + jnp.reshape(b2, (1, -1))


# --------------------------------- demo -------------------------------------

if __name__ == "__main__":
    def build_graph(n):
        # Ring edges i -> (i+1) % n plus self-loops; A[dst, src] = 1.0
        src = jnp.arange(n)
        dst = (src + 1) % n
        adj = jnp.zeros((n, n), jnp.float32)
        adj = adj.at[dst, src].set(1.0)
        adj = adj.at[jnp.arange(n), jnp.arange(n)].set(1.0)
        return adj

    key = jax.random.PRNGKey(0)

    # Case 1: 128-aligned sizes; exercises both the fused fast path and the
    # forced tiled (3-kernel) path.
    N, IN_FEATS, HIDDEN, NUM_CLASSES = 256, 16, 32, 8
    kx, kw1, kb1, kw2, kb2, key = jax.random.split(key, 6)
    x = jax.random.normal(kx, (N, IN_FEATS), jnp.float32)
    w1 = jax.random.normal(kw1, (IN_FEATS, HIDDEN), jnp.float32) * 0.1
    b1 = jax.random.normal(kb1, (1, HIDDEN), jnp.float32) * 0.1
    w2 = jax.random.normal(kw2, (HIDDEN, NUM_CLASSES), jnp.float32) * 0.1
    b2 = jax.random.normal(kb2, (1, NUM_CLASSES), jnp.float32) * 0.1
    adj = build_graph(N)
    a_prep = prepare_adjacency(adj)   # pad + bf16 cast once, outside the forward

    ref = gcn_reference(adj, x, w1, b1, w2, b2)

    out_fused = jax.block_until_ready(gcn_forward(a_prep, x, w1, b1, w2, b2))
    assert out_fused.shape == (N, NUM_CLASSES)
    assert jnp.allclose(out_fused, ref, atol=5e-3, rtol=5e-3), "fused mismatch"

    out_tiled = jax.block_until_ready(
        gcn_forward(a_prep, x, w1, b1, w2, b2, force_tiled=True))
    assert out_tiled.shape == (N, NUM_CLASSES)
    assert jnp.allclose(out_tiled, ref, atol=5e-3, rtol=5e-3), "tiled mismatch"

    # Case 2: ragged sizes (exercises zero-padding correctness).
    N2, F2, H2, C2 = 200, 12, 20, 5
    kx, kw1, kb1, kw2, kb2, key = jax.random.split(key, 6)
    x2 = jax.random.normal(kx, (N2, F2), jnp.float32)
    w1_2 = jax.random.normal(kw1, (F2, H2), jnp.float32) * 0.1
    b1_2 = jax.random.normal(kb1, (1, H2), jnp.float32) * 0.1
    w2_2 = jax.random.normal(kw2, (H2, C2), jnp.float32) * 0.1
    b2_2 = jax.random.normal(kb2, (1, C2), jnp.float32) * 0.1
    adj2 = build_graph(N2)
    out2 = jax.block_until_ready(gcn_forward(adj2, x2, w1_2, b1_2, w2_2, b2_2))
    ref2 = gcn_reference(adj2, x2, w1_2, b1_2, w2_2, b2_2)
    assert out2.shape == (N2, C2)
    assert jnp.allclose(out2, ref2, atol=5e-3, rtol=5e-3), "padded mismatch"

    print("KERNEL_OK")
</pallas_src>

<mosaic_0001>
module attributes {stable_mosaic.version = 11 : i64} {
  func.func @_gcn_fused_kernel(%arg0: memref<256x256xbf16, #tpu.memory_space<vmem>>, %arg1: memref<256x128xf32, #tpu.memory_space<vmem>>, %arg2: memref<128x128xf32, #tpu.memory_space<vmem>>, %arg3: memref<1x128xf32, #tpu.memory_space<vmem>>, %arg4: memref<128x128xf32, #tpu.memory_space<vmem>>, %arg5: memref<1x128xf32, #tpu.memory_space<vmem>>, %arg6: memref<256x128xf32, #tpu.memory_space<vmem>>) attributes {dimension_semantics = [], scalar_prefetch = 0 : i64, scratch_operands = 0 : i64, tpu.core_type = #tpu.core_type<tc>} {
    %c0 = arith.constant 0 : index
    %c0_0 = arith.constant 0 : index
    %0 = vector.load %arg0[%c0, %c0_0] : memref<256x256xbf16, #tpu.memory_space<vmem>>, vector<256x256xbf16>
    %1 = arith.extf %0 : vector<256x256xbf16> to vector<256x256xf32>
    %c0_1 = arith.constant 0 : index
    %c0_2 = arith.constant 0 : index
    %2 = vector.load %arg1[%c0_1, %c0_2] : memref<256x128xf32, #tpu.memory_space<vmem>>, vector<256x128xf32>
    %c0_3 = arith.constant 0 : index
    %c0_4 = arith.constant 0 : index
    %3 = vector.load %arg2[%c0_3, %c0_4] : memref<128x128xf32, #tpu.memory_space<vmem>>, vector<128x128xf32>
    %cst = arith.constant dense<0.000000e+00> : vector<256x128xf32>
    %4 = tpu.matmul %2, %3, %cst {dimension_numbers = #tpu.dot_dimension_numbers<[1], [0], [0], [1], [0, 0, 1, 1], [], []>} : vector<256x128xf32>, vector<128x128xf32>, vector<256x128xf32> -> vector<256x128xf32>
    %cst_5 = arith.constant dense<0.000000e+00> : vector<256x128xf32>
    %5 = tpu.matmul %1, %4, %cst_5 {dimension_numbers = #tpu.dot_dimension_numbers<[1], [0], [0], [1], [0, 0, 1, 1], [], []>} : vector<256x256xf32>, vector<256x128xf32>, vector<256x128xf32> -> vector<256x128xf32>
    %c0_6 = arith.constant 0 : index
    %c0_7 = arith.constant 0 : index
    %6 = vector.load %arg3[%c0_6, %c0_7] : memref<1x128xf32, #tpu.memory_space<vmem>>, vector<1x128xf32>
    %7 = vector.broadcast %6 : vector<1x128xf32> to vector<256x128xf32>
    %8 = arith.addf %5, %7 : vector<256x128xf32>
    %cst_8 = arith.constant 0.000000e+00 : f32
    %9 = vector.broadcast %cst_8 : f32 to vector<256x128xf32>
    %10 = arith.maximumf %8, %9 : vector<256x128xf32>
    %c0_9 = arith.constant 0 : index
    %c0_10 = arith.constant 0 : index
    %11 = vector.load %arg4[%c0_9, %c0_10] : memref<128x128xf32, #tpu.memory_space<vmem>>, vector<128x128xf32>
    %cst_11 = arith.constant dense<0.000000e+00> : vector<256x128xf32>
    %12 = tpu.matmul %10, %11, %cst_11 {dimension_numbers = #tpu.dot_dimension_numbers<[1], [0], [0], [1], [0, 0, 1, 1], [], []>} : vector<256x128xf32>, vector<128x128xf32>, vector<256x128xf32> -> vector<256x128xf32>
    %cst_12 = arith.constant dense<0.000000e+00> : vector<256x128xf32>
    %13 = tpu.matmul %1, %12, %cst_12 {dimension_numbers = #tpu.dot_dimension_numbers<[1], [0], [0], [1], [0, 0, 1, 1], [], []>} : vector<256x256xf32>, vector<256x128xf32>, vector<256x128xf32> -> vector<256x128xf32>
    %c0_13 = arith.constant 0 : index
    %c0_14 = arith.constant 0 : index
    %14 = vector.load %arg5[%c0_13, %c0_14] : memref<1x128xf32, #tpu.memory_space<vmem>>, vector<1x128xf32>
    %15 = vector.broadcast %14 : vector<1x128xf32> to vector<256x128xf32>
    %16 = arith.addf %13, %15 : vector<256x128xf32>
    %c0_15 = arith.constant 0 : index
    %c0_16 = arith.constant 0 : index
    %17 = vector.load %arg6[%c0_15, %c0_16] : memref<256x128xf32, #tpu.memory_space<vmem>>, vector<256x128xf32>
    tpu.vector_store %arg6[%c0_15, %c0_16], %16 {strides = array<i32>} : memref<256x128xf32, #tpu.memory_space<vmem>>, vector<256x128xf32>,
    return
  }
}

</mosaic_0001>

<llo_original>
// kernel: tpu_custom_call.1
$region0: #{tpu_custom_call.1}
  #allocation0 [shape = 'u32[]', space=smem, size = 0x4, offset = 0x4, fixed_abs, tag = 'smem constant byte address 0x4 - core index']
  #allocation1 [shape = 'u32[144,128]{1,0:T(1,128)}', space=vmem, size = 0x12000, scoped, tag = 'internal scratch']
  %s0 = inlined_call_operand.hbm [shape: bf16[256,256], index: 0, kind: input, shape index: {}]
  %s1 = inlined_call_operand.hbm [shape: f32[256,128], index: 1, kind: input, shape index: {}]
  %s2 = inlined_call_operand.hbm [shape: f32[128,128], index: 2, kind: input, shape index: {}]
  %s3 = inlined_call_operand.vmem [shape: f32[1,128], index: 3, kind: input, shape index: {}]
  %s4 = inlined_call_operand.hbm [shape: f32[128,128], index: 4, kind: input, shape index: {}]
  %s5 = inlined_call_operand.vmem [shape: f32[1,128], index: 5, kind: input, shape index: {}]
  %s6 = inlined_call_operand.hbm [shape: f32[256,128], index: 6, kind: output, shape index: {}]
  %s7 = sld [smem:[#allocation0]]
  $region50: #{tpu_custom_call.1} parent=0
    _
  %s9 = ssub.s32 1, %s7
  %s10 = scalar_select 0, %s9, %s7
  $region1: #{tpu_custom_call.1} parent=0
    #allocation2 [shape = 'u8[131072]{0}', space=vmem, size = 0x20000, scoped, tag = 'input window, operand 0, single buffered']
    #allocation3 [shape = 's32[1]{0}', space=sflag, size = 0x4, scoped, tag = 'scoped memory for tpu_custom_call.1']
    #allocation4 [shape = 's32[1]{0}', space=sflag, size = 0x4, scoped, tag = 'scoped memory for tpu_custom_call.1']
    #allocation5 [shape = 'u8[131072]{0}', space=vmem, size = 0x20000, scoped, tag = 'input window, operand 1, single buffered']
    #allocation6 [shape = 's32[1]{0}', space=sflag, size = 0x4, scoped, tag = 'scoped memory for tpu_custom_call.1']
    #allocation7 [shape = 'u8[65536]{0}', space=vmem, size = 0x10000, scoped, tag = 'input window, operand 2, single buffered']
    #allocation8 [shape = 'u8[65536]{0}', space=vmem, size = 0x10000, scoped, tag = 'input window, operand 4, single buffered']
    #allocation9 [shape = 's32[1]{0}', space=sflag, size = 0x4, scoped, tag = 'scoped memory for tpu_custom_call.1']
    #allocation10 [shape = 'u8[131072]{0}', space=vmem, size = 0x20000, scoped, tag = 'output window, operand 0, single buffered']
    %11 = vsyncpa [#allocation3], 0
    %12 = vsyncpa [#allocation6], 0
    %13 = vsyncpa [#allocation9], 0
    %14 = vsyncpa [#allocation4], 0
    // Predicated region
    $region2: #{tpu_custom_call.1} parent=1 // pred_check
      _
    $region3: #{tpu_custom_call.1} parent=1 // pred_check_branch
      %16 = sbr.rel (0) target = $region5
    $region4: #{tpu_custom_call.1} parent=1 // pred_region
      %s18 = ssub.s32 4096, 4096
      %19 = vsyncadd [#allocation3], %s18
      %s20 = sshll.u32 [#allocation2], 4
      %s21 = int_to_ptr.vmem [resolvable:$true] %s20
      %26 = dma.hbm_to_vmem [thread:$0]  %s0, 4096, %s21, [#allocation3], 128, 128, 8
    $region5: #{tpu_custom_call.1} parent=1 // pred_fallthru
      _
    // Predicated region
    $region6: #{tpu_custom_call.1} parent=1 // pred_check
      _
    $region7: #{tpu_custom_call.1} parent=1 // pred_check_branch
      %28 = sbr.rel (0) target = $region9
    $region8: #{tpu_custom_call.1} parent=1 // pred_region
      %s30 = ssub.s32 4096, 4096
      %31 = vsyncadd [#allocation6], %s30
      %s32 = sshll.u32 [#allocation5], 4
      %s33 = int_to_ptr.vmem [resolvable:$true] %s32
      %38 = dma.hbm_to_vmem [thread:$0]  %s1, 4096, %s33, [#allocation6], 128, 128, 8
    $region9: #{tpu_custom_call.1} parent=1 // pred_fallthru
      _
    // Predicated region
    $region10: #{tpu_custom_call.1} parent=1 // pred_check
      _
    $region11: #{tpu_custom_call.1} parent=1 // pred_check_branch
      %40 = sbr.rel (0) target = $region13
    $region12: #{tpu_custom_call.1} parent=1 // pred_region
      %s42 = ssub.s32 2048, 2048
      %43 = vsyncadd [#allocation6], %s42
      %s44 = sshll.u32 [#allocation7], 4
      %s45 = int_to_ptr.vmem [resolvable:$true] %s44
      %50 = dma.hbm_to_vmem [thread:$0]  %s2, 2048, %s45, [#allocation6], 128, 128, 8
    $region13: #{tpu_custom_call.1} parent=1 // pred_fallthru
      _
    // Predicated region
    $region14: #{tpu_custom_call.1} parent=1 // pred_check
      _
    $region15: #{tpu_custom_call.1} parent=1 // pred_check_branch
      %52 = sbr.rel (0) target = $region17
    $region16: #{tpu_custom_call.1} parent=1 // pred_region
      _
    $region17: #{tpu_custom_call.1} parent=1 // pred_fallthru
      _
    // Predicated region
    $region18: #{tpu_custom_call.1} parent=1 // pred_check
      _
    $region19: #{tpu_custom_call.1} parent=1 // pred_check_branch
      %54 = sbr.rel (0) target = $region21
    $region20: #{tpu_custom_call.1} parent=1 // pred_region
      %s56 = ssub.s32 2048, 2048
      %57 = vsyncadd [#allocation9], %s56
      %s58 = sshll.u32 [#allocation8], 4
      %s59 = int_to_ptr.vmem [resolvable:$true] %s58
      %64 = dma.hbm_to_vmem [thread:$0]  %s4, 2048, %s59, [#allocation9], 128, 128, 8
    $region21: #{tpu_custom_call.1} parent=1 // pred_fallthru
      _
    // Predicated region
    $region22: #{tpu_custom_call.1} parent=1 // pred_check
      _
    $region23: #{tpu_custom_call.1} parent=1 // pred_check_branch
      %66 = sbr.rel (0) target = $region25
    $region24: #{tpu_custom_call.1} parent=1 // pred_region
      _
    $region25: #{tpu_custom_call.1} parent=1 // pred_fallthru
      _
    // Predicated region
    $region26: #{tpu_custom_call.1} parent=1 // pred_check
      _
    $region27: #{tpu_custom_call.1} parent=1 // pred_check_branch
      %68 = sbr.rel (0) target = $region29
    $region28: #{tpu_custom_call.1} parent=1 // pred_region
      %69 = dma.done [#allocation3], 4096
    $region29: #{tpu_custom_call.1} parent=1 // pred_fallthru
      _
    // Predicated region
    $region30: #{tpu_custom_call.1} parent=1 // pred_check
      _
    $region31: #{tpu_custom_call.1} parent=1 // pred_check_branch
      %71 = sbr.rel (0) target = $region33
    $region32: #{tpu_custom_call.1} parent=1 // pred_region
      %72 = dma.done [#allocation6], 4096
    $region33: #{tpu_custom_call.1} parent=1 // pred_fallthru
      _
    // Predicated region
    $region34: #{tpu_custom_call.1} parent=1 // pred_check
      _
    $region35: #{tpu_custom_call.1} parent=1 // pred_check_branch
      %74 = sbr.rel (0) target = $region37
    $region36: #{tpu_custom_call.1} parent=1 // pred_region
      %75 = dma.done [#allocation6], 2048
    $region37: #{tpu_custom_call.1} parent=1 // pred_fallthru
      _
    // Predicated region
    $region38: #{tpu_custom_call.1} parent=1 // pred_check
      _
    $region39: #{tpu_custom_call.1} parent=1 // pred_check_branch
      %77 = sbr.rel (0) target = $region41
    $region40: #{tpu_custom_call.1} parent=1 // pred_region
      %78 = dma.done [#allocation9], 2048
    $region41: #{tpu_custom_call.1} parent=1 // pred_fallthru
      _
    %v79 = vld [vmem:[#allocation2] sm:$0xff]
    %v80 = vld [vmem:[#allocation2 + $0x8] sm:$0xff]
    %v81 = vld [vmem:[#allocation2 + $0x10] sm:$0xff]
    %v82 = vld [vmem:[#allocation2 + $0x18] sm:$0xff]
    %v83 = vld [vmem:[#allocation2 + $0x20] sm:$0xff]
    %v84 = vld [vmem:[#allocation2 + $0x28] sm:$0xff]
    %v85 = vld [vmem:[#allocation2 + $0x30] sm:$0xff]
    %v86 = vld [vmem:[#allocation2 + $0x38] sm:$0xff]
    %v87 = vld [vmem:[#allocation2 + $0x40] sm:$0xff]
    %v88 = vld [vmem:[#allocation2 + $0x48] sm:$0xff]
    %v89 = vld [vmem:[#allocation2 + $0x50] sm:$0xff]
    %v90 = vld [vmem:[#allocation2 + $0x58] sm:$0xff]
    %v91 = vld [vmem:[#allocation2 + $0x60] sm:$0xff]
    %v92 = vld [vmem:[#allocation2 + $0x68] sm:$0xff]
    %v93 = vld [vmem:[#allocation2 + $0x70] sm:$0xff]
    %v94 = vld [vmem:[#allocation2 + $0x78] sm:$0xff]
    %v95 = vld [vmem:[#allocation2 + $0x80] sm:$0xff]
    %v96 = vld [vmem:[#allocation2 + $0x88] sm:$0xff]
    %v97 = vld [vmem:[#allocation2 + $0x90] sm:$0xff]
    %v98 = vld [vmem:[#allocation2 + $0x98] sm:$0xff]
    %v99 = vld [vmem:[#allocation2 + $0xa0] sm:$0xff]
    %v100 = vld [vmem:[#allocation2 + $0xa8] sm:$0xff]
    %v101 = vld [vmem:[#allocation2 + $0xb0] sm:$0xff]
    %v102 = vld [vmem:[#allocation2 + $0xb8] sm:$0xff]
    %v103 = vld [vmem:[#allocation2 + $0xc0] sm:$0xff]
    %v104 = vld [vmem:[#allocation2 + $0xc8] sm:$0xff]
    %v105 = vld [vmem:[#allocation2 + $0xd0] sm:$0xff]
    %v106 = vld [vmem:[#allocation2 + $0xd8] sm:$0xff]
    %v107 = vld [vmem:[#allocation2 + $0xe0] sm:$0xff]
    %v108 = vld [vmem:[#allocation2 + $0xe8] sm:$0xff]
    %v109 = vld [vmem:[#allocation2 + $0xf0] sm:$0xff]
    %v110 = vld [vmem:[#allocation2 + $0xf8] sm:$0xff]
    %v111 = vunpack.c.l.bf16 %v79
    %v112 = vunpack.c.h.bf16 %v79
    %v113 = vunpack.c.l.bf16 %v80
    %v114 = vunpack.c.h.bf16 %v80
    %v115 = vunpack.c.l.bf16 %v81
    %v116 = vunpack.c.h.bf16 %v81
    %v117 = vunpack.c.l.bf16 %v82
    %v118 = vunpack.c.h.bf16 %v82
    %v119 = vunpack.c.l.bf16 %v83
    %v120 = vunpack.c.h.bf16 %v83
    %v121 = vunpack.c.l.bf16 %v84
    %v122 = vunpack.c.h.bf16 %v84
    %v123 = vunpack.c.l.bf16 %v85
    %v124 = vunpack.c.h.bf16 %v85
    %v125 = vunpack.c.l.bf16 %v86
    %v126 = vunpack.c.h.bf16 %v86
    %v127 = vunpack.c.l.bf16 %v87
    %v128 = vunpack.c.h.bf16 %v87
    %v129 = vunpack.c.l.bf16 %v88
    %v130 = vunpack.c.h.bf16 %v88
    %v131 = vunpack.c.l.bf16 %v89
    %v132 = vunpack.c.h.bf16 %v89
    %v133 = vunpack.c.l.bf16 %v90
    %v134 = vunpack.c.h.bf16 %v90
    %v135 = vunpack.c.l.bf16 %v91
    %v136 = vunpack.c.h.bf16 %v91
    %v137 = vunpack.c.l.bf16 %v92
    %v138 = vunpack.c.h.bf16 %v92
    %v139 = vunpack.c.l.bf16 %v93
    %v140 = vunpack.c.h.bf16 %v93
    %v141 = vunpack.c.l.bf16 %v94
    %v142 = vunpack.c.h.bf16 %v94
    %v143 = vunpack.c.l.bf16 %v95
    %v144 = vunpack.c.h.bf16 %v95
    %v145 = vunpack.c.l.bf16 %v96
    %v146 = vunpack.c.h.bf16 %v96
    %v147 = vunpack.c.l.bf16 %v97
    %v148 = vunpack.c.h.bf16 %v97
    %v149 = vunpack.c.l.bf16 %v98
    %v150 = vunpack.c.h.bf16 %v98
    %v151 = vunpack.c.l.bf16 %v99
    %v152 = vunpack.c.h.bf16 %v99
    %v153 = vunpack.c.l.bf16 %v100
    %v154 = vunpack.c.h.bf16 %v100
    %v155 = vunpack.c.l.bf16 %v101
    %v156 = vunpack.c.h.bf16 %v101
    %v157 = vunpack.c.l.bf16 %v102
    %v158 = vunpack.c.h.bf16 %v102
    %v159 = vunpack.c.l.bf16 %v103
    %v160 = vunpack.c.h.bf16 %v103
    %v161 = vunpack.c.l.bf16 %v104
    %v162 = vunpack.c.h.bf16 %v104
    %v163 = vunpack.c.l.bf16 %v105
    %v164 = vunpack.c.h.bf16 %v105
    %v165 = vunpack.c.l.bf16 %v106
    %v166 = vunpack.c.h.bf16 %v106
    %v167 = vunpack.c.l.bf16 %v107
    %v168 = vunpack.c.h.bf16 %v107
    %v169 = vunpack.c.l.bf16 %v108
    %v170 = vunpack.c.h.bf16 %v108
    %v171 = vunpack.c.l.bf16 %v109
    %v172 = vunpack.c.h.bf16 %v109
    %v173 = vunpack.c.l.bf16 %v110
    %v174 = vunpack.c.h.bf16 %v110
    %v175 = vld [vmem:[#allocation5] sm:$0xff]
    %v176 = vld [vmem:[#allocation5 + $0x8] sm:$0xff]
    %v177 = vld [vmem:[#allocation5 + $0x10] sm:$0xff]
    %v178 = vld [vmem:[#allocation5 + $0x18] sm:$0xff]
    %v179 = vld [vmem:[#allocation5 + $0x20] sm:$0xff]
    %v180 = vld [vmem:[#allocation5 + $0x28] sm:$0xff]
    %v181 = vld [vmem:[#allocation5 + $0x30] sm:$0xff]
    %v182 = vld [vmem:[#allocation5 + $0x38] sm:$0xff]
    %v183 = vld [vmem:[#allocation5 + $0x40] sm:$0xff]
    %v184 = vld [vmem:[#allocation5 + $0x48] sm:$0xff]
    %v185 = vld [vmem:[#allocation5 + $0x50] sm:$0xff]
    %v186 = vld [vmem:[#allocation5 + $0x58] sm:$0xff]
    %v187 = vld [vmem:[#allocation5 + $0x60] sm:$0xff]
    %v188 = vld [vmem:[#allocation5 + $0x68] sm:$0xff]
    %v189 = vld [vmem:[#allocation5 + $0x70] sm:$0xff]
    %v190 = vld [vmem:[#allocation5 + $0x78] sm:$0xff]
    %v191 = vld [vmem:[#allocation5 + $0x80] sm:$0xff]
    %v192 = vld [vmem:[#allocation5 + $0x88] sm:$0xff]
    %v193 = vld [vmem:[#allocation5 + $0x90] sm:$0xff]
    %v194 = vld [vmem:[#allocation5 + $0x98] sm:$0xff]
    %v195 = vld [vmem:[#allocation5 + $0xa0] sm:$0xff]
    %v196 = vld [vmem:[#allocation5 + $0xa8] sm:$0xff]
    %v197 = vld [vmem:[#allocation5 + $0xb0] sm:$0xff]
    %v198 = vld [vmem:[#allocation5 + $0xb8] sm:$0xff]
    %v199 = vld [vmem:[#allocation5 + $0xc0] sm:$0xff]
    %v200 = vld [vmem:[#allocation5 + $0xc8] sm:$0xff]
    %v201 = vld [vmem:[#allocation5 + $0xd0] sm:$0xff]
    %v202 = vld [vmem:[#allocation5 + $0xd8] sm:$0xff]
    %v203 = vld [vmem:[#allocation5 + $0xe0] sm:$0xff]
    %v204 = vld [vmem:[#allocation5 + $0xe8] sm:$0xff]
    %v205 = vld [vmem:[#allocation5 + $0xf0] sm:$0xff]
    %v206 = vld [vmem:[#allocation5 + $0xf8] sm:$0xff]
    %v207 = vld [vmem:[#allocation7] sm:$0xff]
    %v208 = vld [vmem:[#allocation7 + $0x8] sm:$0xff]
    %v209 = vld [vmem:[#allocation7 + $0x10] sm:$0xff]
    %v210 = vld [vmem:[#allocation7 + $0x18] sm:$0xff]
    %v211 = vld [vmem:[#allocation7 + $0x20] sm:$0xff]
    %v212 = vld [vmem:[#allocation7 + $0x28] sm:$0xff]
    %v213 = vld [vmem:[#allocation7 + $0x30] sm:$0xff]
    %v214 = vld [vmem:[#allocation7 + $0x38] sm:$0xff]
    %v215 = vld [vmem:[#allocation7 + $0x40] sm:$0xff]
    %v216 = vld [vmem:[#allocation7 + $0x48] sm:$0xff]
    %v217 = vld [vmem:[#allocation7 + $0x50] sm:$0xff]
    %v218 = vld [vmem:[#allocation7 + $0x58] sm:$0xff]
    %v219 = vld [vmem:[#allocation7 + $0x60] sm:$0xff]
    %v220 = vld [vmem:[#allocation7 + $0x68] sm:$0xff]
    %v221 = vld [vmem:[#allocation7 + $0x70] sm:$0xff]
    %v222 = vld [vmem:[#allocation7 + $0x78] sm:$0xff]
    %223 = vmatprep.subr.mxu0 0.0
    %224 = vmatpush1.msra.mxu0 %v207
    %225 = vmatprep.subr.mxu0 0.0
    %226 = vmatpush1.msra.mxu0 %v208
    %227 = vmatprep.subr.mxu0 0.0
    %228 = vmatpush1.msra.mxu0 %v209
    %229 = vmatprep.subr.mxu0 0.0
    %230 = vmatpush1.msra.mxu0 %v210
    %231 = vmatprep.subr.mxu0 0.0
    %232 = vmatpush1.msra.mxu0 %v211
    %233 = vmatprep.subr.mxu0 0.0
    %234 = vmatpush1.msra.mxu0 %v212
    %235 = vmatprep.subr.mxu0 0.0
    %236 = vmatpush1.msra.mxu0 %v213
    %237 = vmatprep.subr.mxu0 0.0
    %238 = vmatpush1.msra.mxu0 %v214
    %239 = vmatprep.subr.mxu0 0.0
    %240 = vmatpush1.msra.mxu0 %v215
    %241 = vmatprep.subr.mxu0 0.0
    %242 = vmatpush1.msra.mxu0 %v216
    %243 = vmatprep.subr.mxu0 0.0
    %244 = vmatpush1.msra.mxu0 %v217
    %245 = vmatprep.subr.mxu0 0.0
    %246 = vmatpush1.msra.mxu0 %v218
    %247 = vmatprep.subr.mxu0 0.0
    %248 = vmatpush1.msra.mxu0 %v219
    %249 = vmatprep.subr.mxu0 0.0
    %250 = vmatpush1.msra.mxu0 %v220
    %251 = vmatprep.subr.mxu0 0.0
    %252 = vmatpush1.msra.mxu0 %v221
    %253 = vmatprep.subr.mxu0 0.0
    %254 = vmatpush1.msra.mxu0 %v222
    %255 = vmatprep.subr.mxu0 0.0
    %256 = vmatpush1.msra.mxu0 0.0
    %257 = vmatprep.subr.mxu0 0.0
    %258 = vmatpush1.msra.mxu0 0.0
    %259 = vmatprep.subr.mxu0 0.0
    %260 = vmatpush1.msra.mxu0 0.0
    %261 = vmatprep.subr.mxu0 0.0
    %262 = vmatpush1.msra.mxu0 0.0
    %263 = vmatprep.subr.mxu0 0.0
    %264 = vmatpush1.msra.mxu0 0.0
    %265 = vmatprep.subr.mxu0 0.0
    %266 = vmatpush1.msra.mxu0 0.0
    %267 = vmatprep.subr.mxu0 0.0
    %268 = vmatpush1.msra.mxu0 0.0
    %269 = vmatprep.subr.mxu0 0.0
    %270 = vmatpush1.msra.mxu0 0.0
    %271 = vmatprep.subr.mxu0 0.0
    %272 = vmatpush1.msra.mxu0 0.0
    %273 = vmatprep.subr.mxu0 0.0
    %274 = vmatpush1.msra.mxu0 0.0
    %275 = vmatprep.subr.mxu0 0.0
    %276 = vmatpush1.msra.mxu0 0.0
    %277 = vmatprep.subr.mxu0 0.0
    %278 = vmatpush1.msra.mxu0 0.0
    %279 = vmatprep.subr.mxu0 0.0
    %280 = vmatpush1.msra.mxu0 0.0
    %281 = vmatprep.subr.mxu0 0.0
    %282 = vmatpush1.msra.mxu0 0.0
    %283 = vmatprep.subr.mxu0 0.0
    %284 = vmatpush1.msra.mxu0 0.0
    %285 = vmatprep.subr.mxu0 0.0
    %286 = vmatpush1.msra.mxu0 0.0
    %287 = vmatprep.mubr.f32.mxu0 0.0
    %288 = vmatmul.mubr.f32.gmra.mrb[0].mxu0 %v175
    %v289 = vpop.f32.mrb[0].mxu0
    %v290 = vadd.f32 0.0, %v289
    %v291 = vpop.f32.mrb[0].mxu0
    %292 = vmatprep.mubr.f32.mxu0 0.0
    %293 = vmatmul.mubr.f32.gmra.mrb[0].mxu0 %v176
    %v294 = vpop.f32.mrb[0].mxu0
    %v295 = vadd.f32 0.0, %v294
    %v296 = vpop.f32.mrb[0].mxu0
    %297 = vmatprep.mubr.f32.mxu0 0.0
    %298 = vmatmul.mubr.f32.gmra.mrb[0].mxu0 %v177
    %v299 = vpop.f32.mrb[0].mxu0
    %v300 = vadd.f32 0.0, %v299
    %v301 = vpop.f32.mrb[0].mxu0
    %302 = vmatprep.mubr.f32.mxu0 0.0
    %303 = vmatmul.mubr.f32.gmra.mrb[0].mxu0 %v178
    %v304 = vpop.f32.mrb[0].mxu0
    %v305 = vadd.f32 0.0, %v304
    %v306 = vpop.f32.mrb[0].mxu0
    %307 = vmatprep.mubr.f32.mxu0 0.0
    %308 = vmatmul.mubr.f32.gmra.mrb[0].mxu0 %v179
    %v309 = vpop.f32.mrb[0].mxu0
    %v310 = vadd.f32 0.0, %v309
    %v311 = vpop.f32.mrb[0].mxu0
    %312 = vmatprep.mubr.f32.mxu0 0.0
    %313 = vmatmul.mubr.f32.gmra.mrb[0].mxu0 %v180
    %v314 = vpop.f32.mrb[0].mxu0
    %v315 = vadd.f32 0.0, %v314
    %v316 = vpop.f32.mrb[0].mxu0
    %317 = vmatprep.mubr.f32.mxu0 0.0
    %318 = vmatmul.mubr.f32.gmra.mrb[0].mxu0 %v181
    %v319 = vpop.f32.mrb[0].mxu0
    %v320 = vadd.f32 0.0, %v319
    %v321 = vpop.f32.mrb[0].mxu0
    %322 = vmatprep.mubr.f32.mxu0 0.0
    %323 = vmatmul.mubr.f32.gmra.mrb[0].mxu0 %v182
    %v324 = vpop.f32.mrb[0].mxu0
    %v325 = vadd.f32 0.0, %v324
    %v326 = vpop.f32.mrb[0].mxu0
    %327 = vmatprep.mubr.f32.mxu0 0.0
    %328 = vmatmul.mubr.f32.gmra.mrb[0].mxu0 %v183
    %v329 = vpop.f32.mrb[0].mxu0
    %v330 = vadd.f32 0.0, %v329
    %v331 = vpop.f32.mrb[0].mxu0
    %332 = vmatprep.mubr.f32.mxu0 0.0
    %333 = vmatmul.mubr.f32.gmra.mrb[0].mxu0 %v184
    %v334 = vpop.f32.mrb[0].mxu0
    %v335 = vadd.f32 0.0, %v334
    %v336 = vpop.f32.mrb[0].mxu0
    %337 = vmatprep.mubr.f32.mxu0 0.0
    %338 = vmatmul.mubr.f32.gmra.mrb[0].mxu0 %v185
    %v339 = vpop.f32.mrb[0].mxu0
    %v340 = vadd.f32 0.0, %v339
    %v341 = vpop.f32.mrb[0].mxu0
    %342 = vmatprep.mubr.f32.mxu0 0.0
    %343 = vmatmul.mubr.f32.gmra.mrb[0].mxu0 %v186
    %v344 = vpop.f32.mrb[0].mxu0
    %v345 = vadd.f32 0.0, %v344
    %v346 = vpop.f32.mrb[0].mxu0
    %347 = vmatprep.mubr.f32.mxu0 0.0
    %348 = vmatmul.mubr.f32.gmra.mrb[0].mxu0 %v187
    %v349 = vpop.f32.mrb[0].mxu0
    %v350 = vadd.f32 0.0, %v349
    %v351 = vpop.f32.mrb[0].mxu0
    %352 = vmatprep.mubr.f32.mxu0 0.0
    %353 = vmatmul.mubr.f32.gmra.mrb[0].mxu0 %v188
    %v354 = vpop.f32.mrb[0].mxu0
    %v355 = vadd.f32 0.0, %v354
    %v356 = vpop.f32.mrb[0].mxu0
    %357 = vmatprep.mubr.f32.mxu0 0.0
    %358 = vmatmul.mubr.f32.gmra.mrb[0].mxu0 %v189
    %v359 = vpop.f32.mrb[0].mxu0
    %v360 = vadd.f32 0.0, %v359
    %v361 = vpop.f32.mrb[0].mxu0
    %362 = vmatprep.mubr.f32.mxu0 0.0
    %363 = vmatmul.mubr.f32.gmra.mrb[0].mxu0 %v190
    %v364 = vpop.f32.mrb[0].mxu0
    %v365 = vadd.f32 0.0, %v364
    %v366 = vpop.f32.mrb[0].mxu0
    %367 = vmatprep.mubr.f32.mxu0 0.0
    %368 = vmatmul.mubr.f32.gmra.mrb[0].mxu0 %v191
    %v369 = vpop.f32.mrb[0].mxu0
    %v370 = vadd.f32 0.0, %v369
    %v371 = vpop.f32.mrb[0].mxu0
    %372 = vmatprep.mubr.f32.mxu0 0.0
    %373 = vmatmul.mubr.f32.gmra.mrb[0].mxu0 %v192
    %v374 = vpop.f32.mrb[0].mxu0
    %v375 = vadd.f32 0.0, %v374
    %v376 = vpop.f32.mrb[0].mxu0
    %377 = vmatprep.mubr.f32.mxu0 0.0
    %378 = vmatmul.mubr.f32.gmra.mrb[0].mxu0 %v193
    %v379 = vpop.f32.mrb[0].mxu0
    %v380 = vadd.f32 0.0, %v379
    %v381 = vpop.f32.mrb[0].mxu0
    %382 = vmatprep.mubr.f32.mxu0 0.0
    %383 = vmatmul.mubr.f32.gmra.mrb[0].mxu0 %v194
    %v384 = vpop.f32.mrb[0].mxu0
    %v385 = vadd.f32 0.0, %v384
    %v386 = vpop.f32.mrb[0].mxu0
    %387 = vmatprep.mubr.f32.mxu0 0.0
    %388 = vmatmul.mubr.f32.gmra.mrb[0].mxu0 %v195
    %v389 = vpop.f32.mrb[0].mxu0
    %v390 = vadd.f32 0.0, %v389
    %v391 = vpop.f32.mrb[0].mxu0
    %392 = vmatprep.mubr.f32.mxu0 0.0
    %393 = vmatmul.mubr.f32.gmra.mrb[0].mxu0 %v196
    %v394 = vpop.f32.mrb[0].mxu0
    %v395 = vadd.f32 0.0, %v394
    %v396 = vpop.f32.mrb[0].mxu0
    %397 = vmatprep.mubr.f32.mxu0 0.0
    %398 = vmatmul.mubr.f32.gmra.mrb[0].mxu0 %v197
    %v399 = vpop.f32.mrb[0].mxu0
    %v400 = vadd.f32 0.0, %v399
    %v401 = vpop.f32.mrb[0].mxu0
    %402 = vmatprep.mubr.f32.mxu0 0.0
    %403 = vmatmul.mubr.f32.gmra.mrb[0].mxu0 %v198
    %v404 = vpop.f32.mrb[0].mxu0
    %v405 = vadd.f32 0.0, %v404
    %v406 = vpop.f32.mrb[0].mxu0
    %407 = vmatprep.mubr.f32.mxu0 0.0
    %408 = vmatmul.mubr.f32.gmra.mrb[0].mxu0 %v199
    %v409 = vpop.f32.mrb[0].mxu0
    %v410 = vadd.f32 0.0, %v409
    %v411 = vpop.f32.mrb[0].mxu0
    %412 = vmatprep.mubr.f32.mxu0 0.0
    %413 = vmatmul.mubr.f32.gmra.mrb[0].mxu0 %v200
    %v414 = vpop.f32.mrb[0].mxu0
    %v415 = vadd.f32 0.0, %v414
    %v416 = vpop.f32.mrb[0].mxu0
    %417 = vmatprep.mubr.f32.mxu0 0.0
    %418 = vmatmul.mubr.f32.gmra.mrb[0].mxu0 %v201
    %v419 = vpop.f32.mrb[0].mxu0
    %v420 = vadd.f32 0.0, %v419
    %v421 = vpop.f32.mrb[0].mxu0
    %422 = vmatprep.mubr.f32.mxu0 0.0
    %423 = vmatmul.mubr.f32.gmra.mrb[0].mxu0 %v202
    %v424 = vpop.f32.mrb[0].mxu0
    %v425 = vadd.f32 0.0, %v424
    %v426 = vpop.f32.mrb[0].mxu0
    %427 = vmatprep.mubr.f32.mxu0 0.0
    %428 = vmatmul.mubr.f32.gmra.mrb[0].mxu0 %v203
    %v429 = vpop.f32.mrb[0].mxu0
    %v430 = vadd.f32 0.0, %v429
    %v431 = vpop.f32.mrb[0].mxu0
    %432 = vmatprep.mubr.f32.mxu0 0.0
    %433 = vmatmul.mubr.f32.gmra.mrb[0].mxu0 %v204
    %v434 = vpop.f32.mrb[0].mxu0
    %v435 = vadd.f32 0.0, %v434
    %v436 = vpop.f32.mrb[0].mxu0
    %437 = vmatprep.mubr.f32.mxu0 0.0
    %438 = vmatmul.mubr.f32.gmra.mrb[0].mxu0 %v205
    %v439 = vpop.f32.mrb[0].mxu0
    %v440 = vadd.f32 0.0, %v439
    %v441 = vpop.f32.mrb[0].mxu0
    %442 = vmatprep.mubr.f32.mxu0 0.0
    %443 = vmatmul.mubr.f32.gmra.mrb[0].mxu0 %v206
    %v444 = vpop.f32.mrb[0].mxu0
    %v445 = vadd.f32 0.0, %v444
    %v446 = vpop.f32.mrb[0].mxu0
    %447 = vdwg.mxu0
    %v448 = vld [vmem:[%s3] sm:$0x1]
    %v450 = vlaneseq
    %v451 = vshrl.u32 %v450, 7
    %v452 = vsub.s32 0, %v451
    %v453 = vrot.slane %v448, %v452
    %455 = vmatprep.subr.mxu0 0.0
    %456 = vmatpush1.msra.mxu0 %v290
    %457 = vmatprep.subr.mxu0 0.0
    %458 = vmatpush1.msra.mxu0 %v295
    %459 = vmatprep.subr.mxu0 0.0
    %460 = vmatpush1.msra.mxu0 %v300
    %461 = vmatprep.subr.mxu0 0.0
    %462 = vmatpush1.msra.mxu0 %v305
    %463 = vmatprep.subr.mxu0 0.0
    %464 = vmatpush1.msra.mxu0 %v310
    %465 = vmatprep.subr.mxu0 0.0
    %466 = vmatpush1.msra.mxu0 %v315
    %467 = vmatprep.subr.mxu0 0.0
    %468 = vmatpush1.msra.mxu0 %v320
    %469 = vmatprep.subr.mxu0 0.0
    %470 = vmatpush1.msra.mxu0 %v325
    %471 = vmatprep.subr.mxu0 0.0
    %472 = vmatpush1.msra.mxu0 %v330
    %473 = vmatprep.subr.mxu0 0.0
    %474 = vmatpush1.msra.mxu0 %v335
    %475 = vmatprep.subr.mxu0 0.0
    %476 = vmatpush1.msra.mxu0 %v340
    %477 = vmatprep.subr.mxu0 0.0
    %478 = vmatpush1.msra.mxu0 %v345
    %479 = vmatprep.subr.mxu0 0.0
    %480 = vmatpush1.msra.mxu0 %v350
    %481 = vmatprep.subr.mxu0 0.0
    %482 = vmatpush1.msra.mxu0 %v355
    %483 = vmatprep.subr.mxu0 0.0
    %484 = vmatpush1.msra.mxu0 %v360
    %485 = vmatprep.subr.mxu0 0.0
    %486 = vmatpush1.msra.mxu0 %v365
    %487 = vmatprep.subr.mxu0 0.0
    %488 = vmatpush1.msra.mxu0 %v370
    %489 = vmatprep.subr.mxu0 0.0
    %490 = vmatpush1.msra.mxu0 %v375
    %491 = vmatprep.subr.mxu0 0.0
    %492 = vmatpush1.msra.mxu0 %v380
    %493 = vmatprep.subr.mxu0 0.0
    %494 = vmatpush1.msra.mxu0 %v385
    %495 = vmatprep.subr.mxu0 0.0
    %496 = vmatpush1.msra.mxu0 %v390
    %497 = vmatprep.subr.mxu0 0.0
    %498 = vmatpush1.msra.mxu0 %v395
    %499 = vmatprep.subr.mxu0 0.0
    %500 = vmatpush1.msra.mxu0 %v400
    %501 = vmatprep.subr.mxu0 0.0
    %502 = vmatpush1.msra.mxu0 %v405
    %503 = vmatprep.subr.mxu0 0.0
    %504 = vmatpush1.msra.mxu0 %v410
    %505 = vmatprep.subr.mxu0 0.0
    %506 = vmatpush1.msra.mxu0 %v415
    %507 = vmatprep.subr.mxu0 0.0
    %508 = vmatpush1.msra.mxu0 %v420
    %509 = vmatprep.subr.mxu0 0.0
    %510 = vmatpush1.msra.mxu0 %v425
    %511 = vmatprep.subr.mxu0 0.0
    %512 = vmatpush1.msra.mxu0 %v430
    %513 = vmatprep.subr.mxu0 0.0
    %514 = vmatpush1.msra.mxu0 %v435
    %515 = vmatprep.subr.mxu0 0.0
    %516 = vmatpush1.msra.mxu0 %v440
    %517 = vmatprep.subr.mxu0 0.0
    %518 = vmatpush1.msra.mxu0 %v445
    %519 = vmatprep.mubr.f32.mxu0 %v112
    %520 = vmatmul.mubr.f32.gmra.mrb[0].mxu0 %v111
    %v521 = vpop.f32.mrb[0].mxu0
    %v522 = vadd.f32 %v453, %v521
    %v523 = vpop.f32.mrb[0].mxu0
    %524 = vmatprep.mubr.f32.mxu0 %v114
    %525 = vmatmul.mubr.f32.gmra.mrb[0].mxu0 %v113
    %v526 = vpop.f32.mrb[0].mxu0
    %v527 = vadd.f32 %v453, %v526
    %v528 = vpop.f32.mrb[0].mxu0
    %529 = vmatprep.mubr.f32.mxu0 %v116
    %530 = vmatmul.mubr.f32.gmra.mrb[0].mxu0 %v115
    %v531 = vpop.f32.mrb[0].mxu0
    %v532 = vadd.f32 %v453, %v531
    %v533 = vpop.f32.mrb[0].mxu0
    %534 = vmatprep.mubr.f32.mxu0 %v118
    %535 = vmatmul.mubr.f32.gmra.mrb[0].mxu0 %v117
    %v536 = vpop.f32.mrb[0].mxu0
    %v537 = vadd.f32 %v453, %v536
    %v538 = vpop.f32.mrb[0].mxu0
    %539 = vmatprep.mubr.f32.mxu0 %v120
    %540 = vmatmul.mubr.f32.gmra.mrb[0].mxu0 %v119
    %v541 = vpop.f32.mrb[0].mxu0
    %v542 = vadd.f32 %v453, %v541
    %v543 = vpop.f32.mrb[0].mxu0
    %544 = vmatprep.mubr.f32.mxu0 %v122
    %545 = vmatmul.mubr.f32.gmra.mrb[0].mxu0 %v121
    %v546 = vpop.f32.mrb[0].mxu0
    %v547 = vadd.f32 %v453, %v546
    %v548 = vpop.f32.mrb[0].mxu0
    %549 = vmatprep.mubr.f32.mxu0 %v124
    %550 = vmatmul.mubr.f32.gmra.mrb[0].mxu0 %v123
    %v551 = vpop.f32.mrb[0].mxu0
    %v552 = vadd.f32 %v453, %v551
    %v553 = vpop.f32.mrb[0].mxu0
    %554 = vmatprep.mubr.f32.mxu0 %v126
    %555 = vmatmul.mubr.f32.gmra.mrb[0].mxu0 %v125
    %v556 = vpop.f32.mrb[0].mxu0
    %v557 = vadd.f32 %v453, %v556
    %v558 = vpop.f32.mrb[0].mxu0
    %559 = vmatprep.mubr.f32.mxu0 %v128
    %560 = vmatmul.mubr.f32.gmra.mrb[0].mxu0 %v127
    %v561 = vpop.f32.mrb[0].mxu0
    %v562 = vadd.f32 %v453, %v561
    %v563 = vpop.f32.mrb[0].mxu0
    %564 = vmatprep.mubr.f32.mxu0 %v130
    %565 = vmatmul.mubr.f32.gmra.mrb[0].mxu0 %v129
    %v566 = vpop.f32.mrb[0].mxu0
    %v567 = vadd.f32 %v453, %v566
    %v568 = vpop.f32.mrb[0].mxu0
    %569 = vmatprep.mubr.f32.mxu0 %v132
    %570 = vmatmul.mubr.f32.gmra.mrb[0].mxu0 %v131
    %v571 = vpop.f32.mrb[0].mxu0
    %v572 = vadd.f32 %v453, %v571
    %v573 = vpop.f32.mrb[0].mxu0
    %574 = vmatprep.mubr.f32.mxu0 %v134
    %575 = vmatmul.mubr.f32.gmra.mrb[0].mxu0 %v133
    %v576 = vpop.f32.mrb[0].mxu0
    %v577 = vadd.f32 %v453, %v576
    %v578 = vpop.f32.mrb[0].mxu0
    %579 = vmatprep.mubr.f32.mxu0 %v136
    %580 = vmatmul.mubr.f32.gmra.mrb[0].mxu0 %v135
    %v581 = vpop.f32.mrb[0].mxu0
    %v582 = vadd.f32 %v453, %v581
    %v583 = vpop.f32.mrb[0].mxu0
    %584 = vmatprep.mubr.f32.mxu0 %v138
    %585 = vmatmul.mubr.f32.gmra.mrb[0].mxu0 %v137
    %v586 = vpop.f32.mrb[0].mxu0
    %v587 = vadd.f32 %v453, %v586
    %v588 = vpop.f32.mrb[0].mxu0
    %589 = vmatprep.mubr.f32.mxu0 %v140
    %590 = vmatmul.mubr.f32.gmra.mrb[0].mxu0 %v139
    %v591 = vpop.f32.mrb[0].mxu0
    %v592 = vadd.f32 %v453, %v591
    %v593 = vpop.f32.mrb[0].mxu0
    %594 = vmatprep.mubr.f32.mxu0 %v142
    %595 = vmatmul.mubr.f32.gmra.mrb[0].mxu0 %v141
    %v596 = vpop.f32.mrb[0].mxu0
    %v597 = vadd.f32 %v453, %v596
    %v598 = vpop.f32.mrb[0].mxu0
    %599 = vmatprep.mubr.f32.mxu0 %v144
    %600 = vmatmul.mubr.f32.gmra.mrb[0].mxu0 %v143
    %v601 = vpop.f32.mrb[0].mxu0
    %v602 = vadd.f32 %v453, %v601
    %v603 = vpop.f32.mrb[0].mxu0
    %604 = vmatprep.mubr.f32.mxu0 %v146
    %605 = vmatmul.mubr.f32.gmra.mrb[0].mxu0 %v145
    %v606 = vpop.f32.mrb[0].mxu0
    %v607 = vadd.f32 %v453, %v606
    %v608 = vpop.f32.mrb[0].mxu0
    %609 = vmatprep.mubr.f32.mxu0 %v148
    %610 = vmatmul.mubr.f32.gmra.mrb[0].mxu0 %v147
    %v611 = vpop.f32.mrb[0].mxu0
    %v612 = vadd.f32 %v453, %v611
    %v613 = vpop.f32.mrb[0].mxu0
    %614 = vmatprep.mubr.f32.mxu0 %v150
    %615 = vmatmul.mubr.f32.gmra.mrb[0].mxu0 %v149
    %v616 = vpop.f32.mrb[0].mxu0
    %v617 = vadd.f32 %v453, %v616
    %v618 = vpop.f32.mrb[0].mxu0
    %619 = vmatprep.mubr.f32.mxu0 %v152
    %620 = vmatmul.mubr.f32.gmra.mrb[0].mxu0 %v151
    %v621 = vpop.f32.mrb[0].mxu0
    %v622 = vadd.f32 %v453, %v621
    %v623 = vpop.f32.mrb[0].mxu0
    %624 = vmatprep.mubr.f32.mxu0 %v154
    %625 = vmatmul.mubr.f32.gmra.mrb[0].mxu0 %v153
    %v626 = vpop.f32.mrb[0].mxu0
    %v627 = vadd.f32 %v453, %v626
    %v628 = vpop.f32.mrb[0].mxu0
    %629 = vmatprep.mubr.f32.mxu0 %v156
    %630 = vmatmul.mubr.f32.gmra.mrb[0].mxu0 %v155
    %v631 = vpop.f32.mrb[0].mxu0
    %v632 = vadd.f32 %v453, %v631
    %v633 = vpop.f32.mrb[0].mxu0
    %634 = vmatprep.mubr.f32.mxu0 %v158
    %635 = vmatmul.mubr.f32.gmra.mrb[0].mxu0 %v157
    %v636 = vpop.f32.mrb[0].mxu0
    %v637 = vadd.f32 %v453, %v636
    %v638 = vpop.f32.mrb[0].mxu0
    %639 = vmatprep.mubr.f32.mxu0 %v160
    %640 = vmatmul.mubr.f32.gmra.mrb[0].mxu0 %v159
    %v641 = vpop.f32.mrb[0].mxu0
    %v642 = vadd.f32 %v453, %v641
    %v643 = vpop.f32.mrb[0].mxu0
    %644 = vmatprep.mubr.f32.mxu0 %v162
    %645 = vmatmul.mubr.f32.gmra.mrb[0].mxu0 %v161
    %v646 = vpop.f32.mrb[0].mxu0
    %v647 = vadd.f32 %v453, %v646
    %v648 = vpop.f32.mrb[0].mxu0
    %649 = vmatprep.mubr.f32.mxu0 %v164
    %650 = vmatmul.mubr.f32.gmra.mrb[0].mxu0 %v163
    %v651 = vpop.f32.mrb[0].mxu0
    %v652 = vadd.f32 %v453, %v651
    %v653 = vpop.f32.mrb[0].mxu0
    %654 = vmatprep.mubr.f32.mxu0 %v166
    %655 = vmatmul.mubr.f32.gmra.mrb[0].mxu0 %v165
    %v656 = vpop.f32.mrb[0].mxu0
    %v657 = vadd.f32 %v453, %v656
    %v658 = vpop.f32.mrb[0].mxu0
    %659 = vmatprep.mubr.f32.mxu0 %v168
    %660 = vmatmul.mubr.f32.gmra.mrb[0].mxu0 %v167
    %v661 = vpop.f32.mrb[0].mxu0
    %v662 = vadd.f32 %v453, %v661
    %v663 = vpop.f32.mrb[0].mxu0
    %664 = vmatprep.mubr.f32.mxu0 %v170
    %665 = vmatmul.mubr.f32.gmra.mrb[0].mxu0 %v169
    %v666 = vpop.f32.mrb[0].mxu0
    %v667 = vadd.f32 %v453, %v666
    %v668 = vpop.f32.mrb[0].mxu0
    %669 = vmatprep.mubr.f32.mxu0 %v172
    %670 = vmatmul.mubr.f32.gmra.mrb[0].mxu0 %v171
    %v671 = vpop.f32.mrb[0].mxu0
    %v672 = vadd.f32 %v453, %v671
    %v673 = vpop.f32.mrb[0].mxu0
    %674 = vmatprep.mubr.f32.mxu0 %v174
    %675 = vmatmul.mubr.f32.gmra.mrb[0].mxu0 %v173
    %v676 = vpop.f32.mrb[0].mxu0
    %v677 = vadd.f32 %v453, %v676
    %v678 = vpop.f32.mrb[0].mxu0
    %679 = vdwg.mxu0
    %v680 = vmax.f32 %v522, 0.0
    %v681 = vmax.f32 %v527, 0.0
    %v682 = vmax.f32 %v532, 0.0
    %v683 = vmax.f32 %v537, 0.0
    %v684 = vmax.f32 %v542, 0.0
    %v685 = vmax.f32 %v547, 0.0
    %v686 = vmax.f32 %v552, 0.0
    %v687 = vmax.f32 %v557, 0.0
    %v688 = vmax.f32 %v562, 0.0
    %v689 = vmax.f32 %v567, 0.0
    %v690 = vmax.f32 %v572, 0.0
    %v691 = vmax.f32 %v577, 0.0
    %v692 = vmax.f32 %v582, 0.0
    %v693 = vmax.f32 %v587, 0.0
    %v694 = vmax.f32 %v592, 0.0
    %v695 = vmax.f32 %v597, 0.0
    %v696 = vmax.f32 %v602, 0.0
    %v697 = vmax.f32 %v607, 0.0
    %v698 = vmax.f32 %v612, 0.0
    %v699 = vmax.f32 %v617, 0.0
    %v700 = vmax.f32 %v622, 0.0
    %v701 = vmax.f32 %v627, 0.0
    %v702 = vmax.f32 %v632, 0.0
    %v703 = vmax.f32 %v637, 0.0
    %v704 = vmax.f32 %v642, 0.0
    %v705 = vmax.f32 %v647, 0.0
    %v706 = vmax.f32 %v652, 0.0
    %v707 = vmax.f32 %v657, 0.0
    %v708 = vmax.f32 %v662, 0.0
    %v709 = vmax.f32 %v667, 0.0
    %v710 = vmax.f32 %v672, 0.0
    %v711 = vmax.f32 %v677, 0.0
    %v712 = vld [vmem:[#allocation8] sm:$0xff]
    %v713 = vld [vmem:[#allocation8 + $0x8] sm:$0xff]
    %v714 = vld [vmem:[#allocation8 + $0x10] sm:$0xff]
    %v715 = vld [vmem:[#allocation8 + $0x18] sm:$0xff]
    %v716 = vld [vmem:[#allocation8 + $0x20] sm:$0xff]
    %v717 = vld [vmem:[#allocation8 + $0x28] sm:$0xff]
    %v718 = vld [vmem:[#allocation8 + $0x30] sm:$0xff]
    %v719 = vld [vmem:[#allocation8 + $0x38] sm:$0xff]
    %v720 = vld [vmem:[#allocation8 + $0x40] sm:$0xff]
    %v721 = vld [vmem:[#allocation8 + $0x48] sm:$0xff]
    %v722 = vld [vmem:[#allocation8 + $0x50] sm:$0xff]
    %v723 = vld [vmem:[#allocation8 + $0x58] sm:$0xff]
    %v724 = vld [vmem:[#allocation8 + $0x60] sm:$0xff]
    %v725 = vld [vmem:[#allocation8 + $0x68] sm:$0xff]
    %v726 = vld [vmem:[#allocation8 + $0x70] sm:$0xff]
    %v727 = vld [vmem:[#allocation8 + $0x78] sm:$0xff]
    %728 = vmatprep.subr.mxu0 0.0
    %729 = vmatpush1.msra.mxu0 %v712
    %730 = vmatprep.subr.mxu0 0.0
    %731 = vmatpush1.msra.mxu0 %v713
    %732 = vmatprep.subr.mxu0 0.0
    %733 = vmatpush1.msra.mxu0 %v714
    %734 = vmatprep.subr.mxu0 0.0
    %735 = vmatpush1.msra.mxu0 %v715
    %736 = vmatprep.subr.mxu0 0.0
    %737 = vmatpush1.msra.mxu0 %v716
    %738 = vmatprep.subr.mxu0 0.0
    %739 = vmatpush1.msra.mxu0 %v717
    %740 = vmatprep.subr.mxu0 0.0
    %741 = vmatpush1.msra.mxu0 %v718
    %742 = vmatprep.subr.mxu0 0.0
    %743 = vmatpush1.msra.mxu0 %v719
    %744 = vmatprep.subr.mxu0 0.0
    %745 = vmatpush1.msra.mxu0 %v720
    %746 = vmatprep.subr.mxu0 0.0
    %747 = vmatpush1.msra.mxu0 %v721
    %748 = vmatprep.subr.mxu0 0.0
    %749 = vmatpush1.msra.mxu0 %v722
    %750 = vmatprep.subr.mxu0 0.0
    %751 = vmatpush1.msra.mxu0 %v723
    %752 = vmatprep.subr.mxu0 0.0
    %753 = vmatpush1.msra.mxu0 %v724
    %754 = vmatprep.subr.mxu0 0.0
    %755 = vmatpush1.msra.mxu0 %v725
    %756 = vmatprep.subr.mxu0 0.0
    %757 = vmatpush1.msra.mxu0 %v726
    %758 = vmatprep.subr.mxu0 0.0
    %759 = vmatpush1.msra.mxu0 %v727
    %760 = vmatprep.subr.mxu0 0.0
    %761 = vmatpush1.msra.mxu0 0.0
    %762 = vmatprep.subr.mxu0 0.0
    %763 = vmatpush1.msra.mxu0 0.0
    %764 = vmatprep.subr.mxu0 0.0
    %765 = vmatpush1.msra.mxu0 0.0
    %766 = vmatprep.subr.mxu0 0.0
    %767 = vmatpush1.msra.mxu0 0.0
    %768 = vmatprep.subr.mxu0 0.0
    %769 = vmatpush1.msra.mxu0 0.0
    %770 = vmatprep.subr.mxu0 0.0
    %771 = vmatpush1.msra.mxu0 0.0
    %772 = vmatprep.subr.mxu0 0.0
    %773 = vmatpush1.msra.mxu0 0.0
    %774 = vmatprep.subr.mxu0 0.0
    %775 = vmatpush1.msra.mxu0 0.0
    %776 = vmatprep.subr.mxu0 0.0
    %777 = vmatpush1.msra.mxu0 0.0
    %778 = vmatprep.subr.mxu0 0.0
    %779 = vmatpush1.msra.mxu0 0.0
    %780 = vmatprep.subr.mxu0 0.0
    %781 = vmatpush1.msra.mxu0 0.0
    %782 = vmatprep.subr.mxu0 0.0
    %783 = vmatpush1.msra.mxu0 0.0
    %784 = vmatprep.subr.mxu0 0.0
    %785 = vmatpush1.msra.mxu0 0.0
    %786 = vmatprep.subr.mxu0 0.0
    %787 = vmatpush1.msra.mxu0 0.0
    %788 = vmatprep.subr.mxu0 0.0
    %789 = vmatpush1.msra.mxu0 0.0
    %790 = vmatprep.subr.mxu0 0.0
    %791 = vmatpush1.msra.mxu0 0.0
    %792 = vmatprep.mubr.f32.mxu0 0.0
    %793 = vmatmul.mubr.f32.gmra.mrb[0].mxu0 %v680
    %v794 = vpop.f32.mrb[0].mxu0
    %v795 = vadd.f32 0.0, %v794
    %v796 = vpop.f32.mrb[0].mxu0
    %797 = vmatprep.mubr.f32.mxu0 0.0
    %798 = vmatmul.mubr.f32.gmra.mrb[0].mxu0 %v681
    %v799 = vpop.f32.mrb[0].mxu0
    %v800 = vadd.f32 0.0, %v799
    %v801 = vpop.f32.mrb[0].mxu0
    %802 = vmatprep.mubr.f32.mxu0 0.0
    %803 = vmatmul.mubr.f32.gmra.mrb[0].mxu0 %v682
    %v804 = vpop.f32.mrb[0].mxu0
    %v805 = vadd.f32 0.0, %v804
    %v806 = vpop.f32.mrb[0].mxu0
    %807 = vmatprep.mubr.f32.mxu0 0.0
    %808 = vmatmul.mubr.f32.gmra.mrb[0].mxu0 %v683
    %v809 = vpop.f32.mrb[0].mxu0
    %v810 = vadd.f32 0.0, %v809
    %v811 = vpop.f32.mrb[0].mxu0
    %812 = vmatprep.mubr.f32.mxu0 0.0
    %813 = vmatmul.mubr.f32.gmra.mrb[0].mxu0 %v684
    %v814 = vpop.f32.mrb[0].mxu0
    %v815 = vadd.f32 0.0, %v814
    %v816 = vpop.f32.mrb[0].mxu0
    %817 = vmatprep.mubr.f32.mxu0 0.0
    %818 = vmatmul.mubr.f32.gmra.mrb[0].mxu0 %v685
    %v819 = vpop.f32.mrb[0].mxu0
    %v820 = vadd.f32 0.0, %v819
    %v821 = vpop.f32.mrb[0].mxu0
    %822 = vmatprep.mubr.f32.mxu0 0.0
    %823 = vmatmul.mubr.f32.gmra.mrb[0].mxu0 %v686
    %v824 = vpop.f32.mrb[0].mxu0
    %v825 = vadd.f32 0.0, %v824
    %v826 = vpop.f32.mrb[0].mxu0
    %827 = vmatprep.mubr.f32.mxu0 0.0
    %828 = vmatmul.mubr.f32.gmra.mrb[0].mxu0 %v687
    %v829 = vpop.f32.mrb[0].mxu0
    %v830 = vadd.f32 0.0, %v829
    %v831 = vpop.f32.mrb[0].mxu0
    %832 = vmatprep.mubr.f32.mxu0 0.0
    %833 = vmatmul.mubr.f32.gmra.mrb[0].mxu0 %v688
    %v834 = vpop.f32.mrb[0].mxu0
    %v835 = vadd.f32 0.0, %v834
    %v836 = vpop.f32.mrb[0].mxu0
    %837 = vmatprep.mubr.f32.mxu0 0.0
    %838 = vmatmul.mubr.f32.gmra.mrb[0].mxu0 %v689
    %v839 = vpop.f32.mrb[0].mxu0
    %v840 = vadd.f32 0.0, %v839
    %v841 = vpop.f32.mrb[0].mxu0
    %842 = vmatprep.mubr.f32.mxu0 0.0
    %843 = vmatmul.mubr.f32.gmra.mrb[0].mxu0 %v690
    %v844 = vpop.f32.mrb[0].mxu0
    %v845 = vadd.f32 0.0, %v844
    %v846 = vpop.f32.mrb[0].mxu0
    %847 = vmatprep.mubr.f32.mxu0 0.0
    %848 = vmatmul.mubr.f32.gmra.mrb[0].mxu0 %v691
    %v849 = vpop.f32.mrb[0].mxu0
    %v850 = vadd.f32 0.0, %v849
    %v851 = vpop.f32.mrb[0].mxu0
    %852 = vmatprep.mubr.f32.mxu0 0.0
    %853 = vmatmul.mubr.f32.gmra.mrb[0].mxu0 %v692
    %v854 = vpop.f32.mrb[0].mxu0
    %v855 = vadd.f32 0.0, %v854
    %v856 = vpop.f32.mrb[0].mxu0
    %857 = vmatprep.mubr.f32.mxu0 0.0
    %858 = vmatmul.mubr.f32.gmra.mrb[0].mxu0 %v693
    %v859 = vpop.f32.mrb[0].mxu0
    %v860 = vadd.f32 0.0, %v859
    %v861 = vpop.f32.mrb[0].mxu0
    %862 = vmatprep.mubr.f32.mxu0 0.0
    %863 = vmatmul.mubr.f32.gmra.mrb[0].mxu0 %v694
    %v864 = vpop.f32.mrb[0].mxu0
    %v865 = vadd.f32 0.0, %v864
    %v866 = vpop.f32.mrb[0].mxu0
    %867 = vmatprep.mubr.f32.mxu0 0.0
    %868 = vmatmul.mubr.f32.gmra.mrb[0].mxu0 %v695
    %v869 = vpop.f32.mrb[0].mxu0
    %v870 = vadd.f32 0.0, %v869
    %v871 = vpop.f32.mrb[0].mxu0
    %872 = vmatprep.mubr.f32.mxu0 0.0
    %873 = vmatmul.mubr.f32.gmra.mrb[0].mxu0 %v696
    %v874 = vpop.f32.mrb[0].mxu0
    %v875 = vadd.f32 0.0, %v874
    %v876 = vpop.f32.mrb[0].mxu0
    %877 = vmatprep.mubr.f32.mxu0 0.0
    %878 = vmatmul.mubr.f32.gmra.mrb[0].mxu0 %v697
    %v879 = vpop.f32.mrb[0].mxu0
    %v880 = vadd.f32 0.0, %v879
    %v881 = vpop.f32.mrb[0].mxu0
    %882 = vmatprep.mubr.f32.mxu0 0.0
    %883 = vmatmul.mubr.f32.gmra.mrb[0].mxu0 %v698
    %v884 = vpop.f32.mrb[0].mxu0
    %v885 = vadd.f32 0.0, %v884
    %v886 = vpop.f32.mrb[0].mxu0
    %887 = vmatprep.mubr.f32.mxu0 0.0
    %888 = vmatmul.mubr.f32.gmra.mrb[0].mxu0 %v699
    %v889 = vpop.f32.mrb[0].mxu0
    %v890 = vadd.f32 0.0, %v889
    %v891 = vpop.f32.mrb[0].mxu0
    %892 = vmatprep.mubr.f32.mxu0 0.0
    %893 = vmatmul.mubr.f32.gmra.mrb[0].mxu0 %v700
    %v894 = vpop.f32.mrb[0].mxu0
    %v895 = vadd.f32 0.0, %v894
    %v896 = vpop.f32.mrb[0].mxu0
    %897 = vmatprep.mubr.f32.mxu0 0.0
    %898 = vmatmul.mubr.f32.gmra.mrb[0].mxu0 %v701
    %v899 = vpop.f32.mrb[0].mxu0
    %v900 = vadd.f32 0.0, %v899
    %v901 = vpop.f32.mrb[0].mxu0
    %902 = vmatprep.mubr.f32.mxu0 0.0
    %903 = vmatmul.mubr.f32.gmra.mrb[0].mxu0 %v702
    %v904 = vpop.f32.mrb[0].mxu0
    %v905 = vadd.f32 0.0, %v904
    %v906 = vpop.f32.mrb[0].mxu0
    %907 = vmatprep.mubr.f32.mxu0 0.0
    %908 = vmatmul.mubr.f32.gmra.mrb[0].mxu0 %v703
    %v909 = vpop.f32.mrb[0].mxu0
    %v910 = vadd.f32 0.0, %v909
    %v911 = vpop.f32.mrb[0].mxu0
    %912 = vmatprep.mubr.f32.mxu0 0.0
    %913 = vmatmul.mubr.f32.gmra.mrb[0].mxu0 %v704
    %v914 = vpop.f32.mrb[0].mxu0
    %v915 = vadd.f32 0.0, %v914
    %v916 = vpop.f32.mrb[0].mxu0
    %917 = vmatprep.mubr.f32.mxu0 0.0
    %918 = vmatmul.mubr.f32.gmra.mrb[0].mxu0 %v705
    %v919 = vpop.f32.mrb[0].mxu0
    %v920 = vadd.f32 0.0, %v919
    %v921 = vpop.f32.mrb[0].mxu0
    %922 = vmatprep.mubr.f32.mxu0 0.0
    %923 = vmatmul.mubr.f32.gmra.mrb[0].mxu0 %v706
    %v924 = vpop.f32.mrb[0].mxu0
    %v925 = vadd.f32 0.0, %v924
    %v926 = vpop.f32.mrb[0].mxu0
    %927 = vmatprep.mubr.f32.mxu0 0.0
    %928 = vmatmul.mubr.f32.gmra.mrb[0].mxu0 %v707
    %v929 = vpop.f32.mrb[0].mxu0
    %v930 = vadd.f32 0.0, %v929
    %v931 = vpop.f32.mrb[0].mxu0
    %932 = vmatprep.mubr.f32.mxu0 0.0
    %933 = vmatmul.mubr.f32.gmra.mrb[0].mxu0 %v708
    %v934 = vpop.f32.mrb[0].mxu0
    %v935 = vadd.f32 0.0, %v934
    %v936 = vpop.f32.mrb[0].mxu0
    %937 = vmatprep.mubr.f32.mxu0 0.0
    %938 = vmatmul.mubr.f32.gmra.mrb[0].mxu0 %v709
    %v939 = vpop.f32.mrb[0].mxu0
    %v940 = vadd.f32 0.0, %v939
    %v941 = vpop.f32.mrb[0].mxu0
    %942 = vmatprep.mubr.f32.mxu0 0.0
    %943 = vmatmul.mubr.f32.gmra.mrb[0].mxu0 %v710
    %v944 = vpop.f32.mrb[0].mxu0
    %v945 = vadd.f32 0.0, %v944
    %v946 = vpop.f32.mrb[0].mxu0
    %947 = vmatprep.mubr.f32.mxu0 0.0
    %948 = vmatmul.mubr.f32.gmra.mrb[0].mxu0 %v711
    %v949 = vpop.f32.mrb[0].mxu0
    %v950 = vadd.f32 0.0, %v949
    %v951 = vpop.f32.mrb[0].mxu0
    %952 = vdwg.mxu0
    %v953 = vld [vmem:[%s5] sm:$0x1]
    %v955 = vlaneseq
    %v956 = vshrl.u32 %v955, 7
    %v957 = vsub.s32 0, %v956
    %v958 = vrot.slane %v953, %v957
    %960 = vmatprep.subr.mxu0 0.0
    %961 = vmatpush1.msra.mxu0 %v795
    %962 = vmatprep.subr.mxu0 0.0
    %963 = vmatpush1.msra.mxu0 %v800
    %964 = vmatprep.subr.mxu0 0.0
    %965 = vmatpush1.msra.mxu0 %v805
    %966 = vmatprep.subr.mxu0 0.0
    %967 = vmatpush1.msra.mxu0 %v810
    %968 = vmatprep.subr.mxu0 0.0
    %969 = vmatpush1.msra.mxu0 %v815
    %970 = vmatprep.subr.mxu0 0.0
    %971 = vmatpush1.msra.mxu0 %v820
    %972 = vmatprep.subr.mxu0 0.0
    %973 = vmatpush1.msra.mxu0 %v825
    %974 = vmatprep.subr.mxu0 0.0
    %975 = vmatpush1.msra.mxu0 %v830
    %976 = vmatprep.subr.mxu0 0.0
    %977 = vmatpush1.msra.mxu0 %v835
    %978 = vmatprep.subr.mxu0 0.0
    %979 = vmatpush1.msra.mxu0 %v840
    %980 = vmatprep.subr.mxu0 0.0
    %981 = vmatpush1.msra.mxu0 %v845
    %982 = vmatprep.subr.mxu0 0.0
    %983 = vmatpush1.msra.mxu0 %v850
    %984 = vmatprep.subr.mxu0 0.0
    %985 = vmatpush1.msra.mxu0 %v855
    %986 = vmatprep.subr.mxu0 0.0
    %987 = vmatpush1.msra.mxu0 %v860
    %988 = vmatprep.subr.mxu0 0.0
    %989 = vmatpush1.msra.mxu0 %v865
    %990 = vmatprep.subr.mxu0 0.0
    %991 = vmatpush1.msra.mxu0 %v870
    %992 = vmatprep.subr.mxu0 0.0
    %993 = vmatpush1.msra.mxu0 %v875
    %994 = vmatprep.subr.mxu0 0.0
    %995 = vmatpush1.msra.mxu0 %v880
    %996 = vmatprep.subr.mxu0 0.0
    %997 = vmatpush1.msra.mxu0 %v885
    %998 = vmatprep.subr.mxu0 0.0
    %999 = vmatpush1.msra.mxu0 %v890
    %1000 = vmatprep.subr.mxu0 0.0
    %1001 = vmatpush1.msra.mxu0 %v895
    %1002 = vmatprep.subr.mxu0 0.0
    %1003 = vmatpush1.msra.mxu0 %v900
    %1004 = vmatprep.subr.mxu0 0.0
    %1005 = vmatpush1.msra.mxu0 %v905
    %1006 = vmatprep.subr.mxu0 0.0
    %1007 = vmatpush1.msra.mxu0 %v910
    %1008 = vmatprep.subr.mxu0 0.0
    %1009 = vmatpush1.msra.mxu0 %v915
    %1010 = vmatprep.subr.mxu0 0.0
    %1011 = vmatpush1.msra.mxu0 %v920
    %1012 = vmatprep.subr.mxu0 0.0
    %1013 = vmatpush1.msra.mxu0 %v925
    %1014 = vmatprep.subr.mxu0 0.0
    %1015 = vmatpush1.msra.mxu0 %v930
    %1016 = vmatprep.subr.mxu0 0.0
    %1017 = vmatpush1.msra.mxu0 %v935
    %1018 = vmatprep.subr.mxu0 0.0
    %1019 = vmatpush1.msra.mxu0 %v940
    %1020 = vmatprep.subr.mxu0 0.0
    %1021 = vmatpush1.msra.mxu0 %v945
    %1022 = vmatprep.subr.mxu0 0.0
    %1023 = vmatpush1.msra.mxu0 %v950
    %1024 = vmatprep.mubr.f32.mxu0 %v112
    %1025 = vmatmul.mubr.f32.gmra.mrb[0].mxu0 %v111
    %v1026 = vpop.f32.mrb[0].mxu0
    %v1027 = vadd.f32 %v958, %v1026
    %v1028 = vpop.f32.mrb[0].mxu0
    %1029 = vmatprep.mubr.f32.mxu0 %v114
    %1030 = vmatmul.mubr.f32.gmra.mrb[0].mxu0 %v113
    %v1031 = vpop.f32.mrb[0].mxu0
    %v1032 = vadd.f32 %v958, %v1031
    %v1033 = vpop.f32.mrb[0].mxu0
    %1034 = vmatprep.mubr.f32.mxu0 %v116
    %1035 = vmatmul.mubr.f32.gmra.mrb[0].mxu0 %v115
    %v1036 = vpop.f32.mrb[0].mxu0
    %v1037 = vadd.f32 %v958, %v1036
    %v1038 = vpop.f32.mrb[0].mxu0
    %1039 = vmatprep.mubr.f32.mxu0 %v118
    %1040 = vmatmul.mubr.f32.gmra.mrb[0].mxu0 %v117
    %v1041 = vpop.f32.mrb[0].mxu0
    %v1042 = vadd.f32 %v958, %v1041
    %v1043 = vpop.f32.mrb[0].mxu0
    %1044 = vmatprep.mubr.f32.mxu0 %v120
    %1045 = vmatmul.mubr.f32.gmra.mrb[0].mxu0 %v119
    %v1046 = vpop.f32.mrb[0].mxu0
    %v1047 = vadd.f32 %v958, %v1046
    %v1048 = vpop.f32.mrb[0].mxu0
    %1049 = vmatprep.mubr.f32.mxu0 %v122
    %1050 = vmatmul.mubr.f32.gmra.mrb[0].mxu0 %v121
    %v1051 = vpop.f32.mrb[0].mxu0
    %v1052 = vadd.f32 %v958, %v1051
    %v1053 = vpop.f32.mrb[0].mxu0
    %1054 = vmatprep.mubr.f32.mxu0 %v124
    %1055 = vmatmul.mubr.f32.gmra.mrb[0].mxu0 %v123
    %v1056 = vpop.f32.mrb[0].mxu0
    %v1057 = vadd.f32 %v958, %v1056
    %v1058 = vpop.f32.mrb[0].mxu0
    %1059 = vmatprep.mubr.f32.mxu0 %v126
    %1060 = vmatmul.mubr.f32.gmra.mrb[0].mxu0 %v125
    %v1061 = vpop.f32.mrb[0].mxu0
    %v1062 = vadd.f32 %v958, %v1061
    %v1063 = vpop.f32.mrb[0].mxu0
    %1064 = vmatprep.mubr.f32.mxu0 %v128
    %1065 = vmatmul.mubr.f32.gmra.mrb[0].mxu0 %v127
    %v1066 = vpop.f32.mrb[0].mxu0
    %v1067 = vadd.f32 %v958, %v1066
    %v1068 = vpop.f32.mrb[0].mxu0
    %1069 = vmatprep.mubr.f32.mxu0 %v130
    %1070 = vmatmul.mubr.f32.gmra.mrb[0].mxu0 %v129
    %v1071 = vpop.f32.mrb[0].mxu0
    %v1072 = vadd.f32 %v958, %v1071
    %v1073 = vpop.f32.mrb[0].mxu0
    %1074 = vmatprep.mubr.f32.mxu0 %v132
    %1075 = vmatmul.mubr.f32.gmra.mrb[0].mxu0 %v131
    %v1076 = vpop.f32.mrb[0].mxu0
    %v1077 = vadd.f32 %v958, %v1076
    %v1078 = vpop.f32.mrb[0].mxu0
    %1079 = vmatprep.mubr.f32.mxu0 %v134
    %1080 = vmatmul.mubr.f32.gmra.mrb[0].mxu0 %v133
    %v1081 = vpop.f32.mrb[0].mxu0
    %v1082 = vadd.f32 %v958, %v1081
    %v1083 = vpop.f32.mrb[0].mxu0
    %1084 = vmatprep.mubr.f32.mxu0 %v136
    %1085 = vmatmul.mubr.f32.gmra.mrb[0].mxu0 %v135
    %v1086 = vpop.f32.mrb[0].mxu0
    %v1087 = vadd.f32 %v958, %v1086
    %v1088 = vpop.f32.mrb[0].mxu0
    %1089 = vmatprep.mubr.f32.mxu0 %v138
    %1090 = vmatmul.mubr.f32.gmra.mrb[0].mxu0 %v137
    %v1091 = vpop.f32.mrb[0].mxu0
    %v1092 = vadd.f32 %v958, %v1091
    %v1093 = vpop.f32.mrb[0].mxu0
    %1094 = vmatprep.mubr.f32.mxu0 %v140
    %1095 = vmatmul.mubr.f32.gmra.mrb[0].mxu0 %v139
    %v1096 = vpop.f32.mrb[0].mxu0
    %v1097 = vadd.f32 %v958, %v1096
    %v1098 = vpop.f32.mrb[0].mxu0
    %1099 = vmatprep.mubr.f32.mxu0 %v142
    %1100 = vmatmul.mubr.f32.gmra.mrb[0].mxu0 %v141
    %v1101 = vpop.f32.mrb[0].mxu0
    %v1102 = vadd.f32 %v958, %v1101
    %v1103 = vpop.f32.mrb[0].mxu0
    %1104 = vmatprep.mubr.f32.mxu0 %v144
    %1105 = vmatmul.mubr.f32.gmra.mrb[0].mxu0 %v143
    %v1106 = vpop.f32.mrb[0].mxu0
    %v1107 = vadd.f32 %v958, %v1106
    %v1108 = vpop.f32.mrb[0].mxu0
    %1109 = vmatprep.mubr.f32.mxu0 %v146
    %1110 = vmatmul.mubr.f32.gmra.mrb[0].mxu0 %v145
    %v1111 = vpop.f32.mrb[0].mxu0
    %v1112 = vadd.f32 %v958, %v1111
    %v1113 = vpop.f32.mrb[0].mxu0
    %1114 = vmatprep.mubr.f32.mxu0 %v148
    %1115 = vmatmul.mubr.f32.gmra.mrb[0].mxu0 %v147
    %v1116 = vpop.f32.mrb[0].mxu0
    %v1117 = vadd.f32 %v958, %v1116
    %v1118 = vpop.f32.mrb[0].mxu0
    %1119 = vmatprep.mubr.f32.mxu0 %v150
    %1120 = vmatmul.mubr.f32.gmra.mrb[0].mxu0 %v149
    %v1121 = vpop.f32.mrb[0].mxu0
    %v1122 = vadd.f32 %v958, %v1121
    %v1123 = vpop.f32.mrb[0].mxu0
    %1124 = vmatprep.mubr.f32.mxu0 %v152
    %1125 = vmatmul.mubr.f32.gmra.mrb[0].mxu0 %v151
    %v1126 = vpop.f32.mrb[0].mxu0
    %v1127 = vadd.f32 %v958, %v1126
    %v1128 = vpop.f32.mrb[0].mxu0
    %1129 = vmatprep.mubr.f32.mxu0 %v154
    %1130 = vmatmul.mubr.f32.gmra.mrb[0].mxu0 %v153
    %v1131 = vpop.f32.mrb[0].mxu0
    %v1132 = vadd.f32 %v958, %v1131
    %v1133 = vpop.f32.mrb[0].mxu0
    %1134 = vmatprep.mubr.f32.mxu0 %v156
    %1135 = vmatmul.mubr.f32.gmra.mrb[0].mxu0 %v155
    %v1136 = vpop.f32.mrb[0].mxu0
    %v1137 = vadd.f32 %v958, %v1136
    %v1138 = vpop.f32.mrb[0].mxu0
    %1139 = vmatprep.mubr.f32.mxu0 %v158
    %1140 = vmatmul.mubr.f32.gmra.mrb[0].mxu0 %v157
    %v1141 = vpop.f32.mrb[0].mxu0
    %v1142 = vadd.f32 %v958, %v1141
    %v1143 = vpop.f32.mrb[0].mxu0
    %1144 = vmatprep.mubr.f32.mxu0 %v160
    %1145 = vmatmul.mubr.f32.gmra.mrb[0].mxu0 %v159
    %v1146 = vpop.f32.mrb[0].mxu0
    %v1147 = vadd.f32 %v958, %v1146
    %v1148 = vpop.f32.mrb[0].mxu0
    %1149 = vmatprep.mubr.f32.mxu0 %v162
    %1150 = vmatmul.mubr.f32.gmra.mrb[0].mxu0 %v161
    %v1151 = vpop.f32.mrb[0].mxu0
    %v1152 = vadd.f32 %v958, %v1151
    %v1153 = vpop.f32.mrb[0].mxu0
    %1154 = vmatprep.mubr.f32.mxu0 %v164
    %1155 = vmatmul.mubr.f32.gmra.mrb[0].mxu0 %v163
    %v1156 = vpop.f32.mrb[0].mxu0
    %v1157 = vadd.f32 %v958, %v1156
    %v1158 = vpop.f32.mrb[0].mxu0
    %1159 = vmatprep.mubr.f32.mxu0 %v166
    %1160 = vmatmul.mubr.f32.gmra.mrb[0].mxu0 %v165
    %v1161 = vpop.f32.mrb[0].mxu0
    %v1162 = vadd.f32 %v958, %v1161
    %v1163 = vpop.f32.mrb[0].mxu0
    %1164 = vmatprep.mubr.f32.mxu0 %v168
    %1165 = vmatmul.mubr.f32.gmra.mrb[0].mxu0 %v167
    %v1166 = vpop.f32.mrb[0].mxu0
    %v1167 = vadd.f32 %v958, %v1166
    %v1168 = vpop.f32.mrb[0].mxu0
    %1169 = vmatprep.mubr.f32.mxu0 %v170
    %1170 = vmatmul.mubr.f32.gmra.mrb[0].mxu0 %v169
    %v1171 = vpop.f32.mrb[0].mxu0
    %v1172 = vadd.f32 %v958, %v1171
    %v1173 = vpop.f32.mrb[0].mxu0
    %1174 = vmatprep.mubr.f32.mxu0 %v172
    %1175 = vmatmul.mubr.f32.gmra.mrb[0].mxu0 %v171
    %v1176 = vpop.f32.mrb[0].mxu0
    %v1177 = vadd.f32 %v958, %v1176
    %v1178 = vpop.f32.mrb[0].mxu0
    %1179 = vmatprep.mubr.f32.mxu0 %v174
    %1180 = vmatmul.mubr.f32.gmra.mrb[0].mxu0 %v173
    %v1181 = vpop.f32.mrb[0].mxu0
    %v1182 = vadd.f32 %v958, %v1181
    %v1183 = vpop.f32.mrb[0].mxu0
    %1184 = vdwg.mxu0
    %1185 = vst [vmem:[#allocation10] sm:$0xff] %v1027
    %1186 = vst [vmem:[#allocation10 + $0x8] sm:$0xff] %v1032
    %1187 = vst [vmem:[#allocation10 + $0x10] sm:$0xff] %v1037
    %1188 = vst [vmem:[#allocation10 + $0x18] sm:$0xff] %v1042
    %1189 = vst [vmem:[#allocation10 + $0x20] sm:$0xff] %v1047
    %1190 = vst [vmem:[#allocation10 + $0x28] sm:$0xff] %v1052
    %1191 = vst [vmem:[#allocation10 + $0x30] sm:$0xff] %v1057
    %1192 = vst [vmem:[#allocation10 + $0x38] sm:$0xff] %v1062
    %1193 = vst [vmem:[#allocation10 + $0x40] sm:$0xff] %v1067
    %1194 = vst [vmem:[#allocation10 + $0x48] sm:$0xff] %v1072
    %1195 = vst [vmem:[#allocation10 + $0x50] sm:$0xff] %v1077
    %1196 = vst [vmem:[#allocation10 + $0x58] sm:$0xff] %v1082
    %1197 = vst [vmem:[#allocation10 + $0x60] sm:$0xff] %v1087
    %1198 = vst [vmem:[#allocation10 + $0x68] sm:$0xff] %v1092
    %1199 = vst [vmem:[#allocation10 + $0x70] sm:$0xff] %v1097
    %1200 = vst [vmem:[#allocation10 + $0x78] sm:$0xff] %v1102
    %1201 = vst [vmem:[#allocation10 + $0x80] sm:$0xff] %v1107
    %1202 = vst [vmem:[#allocation10 + $0x88] sm:$0xff] %v1112
    %1203 = vst [vmem:[#allocation10 + $0x90] sm:$0xff] %v1117
    %1204 = vst [vmem:[#allocation10 + $0x98] sm:$0xff] %v1122
    %1205 = vst [vmem:[#allocation10 + $0xa0] sm:$0xff] %v1127
    %1206 = vst [vmem:[#allocation10 + $0xa8] sm:$0xff] %v1132
    %1207 = vst [vmem:[#allocation10 + $0xb0] sm:$0xff] %v1137
    %1208 = vst [vmem:[#allocation10 + $0xb8] sm:$0xff] %v1142
    %1209 = vst [vmem:[#allocation10 + $0xc0] sm:$0xff] %v1147
    %1210 = vst [vmem:[#allocation10 + $0xc8] sm:$0xff] %v1152
    %1211 = vst [vmem:[#allocation10 + $0xd0] sm:$0xff] %v1157
    %1212 = vst [vmem:[#allocation10 + $0xd8] sm:$0xff] %v1162
    %1213 = vst [vmem:[#allocation10 + $0xe0] sm:$0xff] %v1167
    %1214 = vst [vmem:[#allocation10 + $0xe8] sm:$0xff] %v1172
    %1215 = vst [vmem:[#allocation10 + $0xf0] sm:$0xff] %v1177
    %1216 = vst [vmem:[#allocation10 + $0xf8] sm:$0xff] %v1182
    // Predicated region
    $region42: #{tpu_custom_call.1} parent=1 // pred_check
      _
    $region43: #{tpu_custom_call.1} parent=1 // pred_check_branch
      %1218 = sbr.rel (0) target = $region45
    $region44: #{tpu_custom_call.1} parent=1 // pred_region
      %s1220 = ssub.s32 4096, 4096
      %1221 = vsyncadd [#allocation4], %s1220
      %s1222 = sshll.u32 [#allocation10], 4
      %s1223 = int_to_ptr.vmem [resolvable:$true] %s1222
      %1228 = dma.vmem_to_hbm [thread:$0]  %s1223, 4096, %s6, [#allocation4], 128, 128, 8
    $region45: #{tpu_custom_call.1} parent=1 // pred_fallthru
      _
    // Predicated region
    $region46: #{tpu_custom_call.1} parent=1 // pred_check
      _
    $region47: #{tpu_custom_call.1} parent=1 // pred_check_branch
      %1230 = sbr.rel (0) target = $region49
    $region48: #{tpu_custom_call.1} parent=1 // pred_region
      %1231 = dma.done [#allocation4], 4096
    $region49: #{tpu_custom_call.1} parent=1 // pred_fallthru
      _
    %1232 = vsyncpa [#allocation3], 1
    %1233 = vsyncpa [#allocation6], 1
    %1234 = vsyncpa [#allocation9], 1
    %1235 = vsyncpa [#allocation4], 1

</llo_original>
